<compile_context>
chip_gen: v7x
topology: tpu7x:2x2x1
jax: 0.10.0
libtpu: 0.0.40
codegen_flags: <defaults>
</compile_context>

<pallas_src>
import functools

import jax
import jax.numpy as jnp
from jax.experimental import pallas as pl
from jax.experimental.pallas import tpu as pltpu

ASV_DIM = 3


def _round_up(x, m):
    return pl.cdiv(x, m) * m


def _mtp_kernel(x_ref, w1_ref, b1_ref, w2_ref, b2_ref, o_ref, acc_ref, *,
                num_modes, d_out, apply_softmax, compute_dtype):
    """Fused fc1 (K-tiled) + fc2 + optional masked softmax.

    x_ref:   (B_p, tk)          current K-tile of concat(features, asv)
    w1_ref:  (tk, Hid_p)        current K-tile of fc1 weight (pre-transposed)
    b1_ref:  (1, Hid_p)         fc1 bias (f32, resident)
    w2_ref:  (Hid_p, D_out_p)   fc2 weight (pre-transposed, lane-padded, resident)
    b2_ref:  (1, D_out_p)       fc2 bias (f32, zero-padded, resident)
    o_ref:   (B_p, D_out_p)     output (resident block, written at last K step)
    acc_ref: (B_p, Hid_p)       f32 VMEM accumulator for fc1
    """
    k = pl.program_id(0)

    @pl.when(k == 0)
    def _init():
        # Seed the accumulator with the fc1 bias (broadcast over the batch),
        # so no separate bias add is needed in the epilogue.
        acc_ref[...] = jnp.broadcast_to(b1_ref[...], acc_ref.shape)

    acc_ref[...] += jnp.dot(x_ref[...], w1_ref[...],
                            preferred_element_type=jnp.float32)

    @pl.when(k == pl.num_programs(0) - 1)
    def _finalize():
        h = acc_ref[...]                                  # fc1 output (f32)
        out = jnp.dot(h.astype(compute_dtype), w2_ref[...],
                      preferred_element_type=jnp.float32) + b2_ref[...]
        if apply_softmax:
            bp, dp = out.shape
            col = jax.lax.broadcasted_iota(jnp.int32, (bp, dp), 1)
            # Real (unpadded) mode-probability columns are [d_out-num_modes, d_out).
            mode_mask = (col >= d_out - num_modes) & (col < d_out)
            masked = jnp.where(mode_mask, out, -jnp.inf)
            m = jnp.max(masked, axis=-1, keepdims=True)
            e = jnp.exp(masked - m)           # exp(-inf) == 0 for non-mode lanes
            s = jnp.sum(e, axis=-1, keepdims=True)
            probs = e * pl.reciprocal(s, approx=True)
            out = jnp.where(mode_mask, probs, out)
        o_ref[...] = out.astype(o_ref.dtype)


def prepare_mtp_params(params, *, d_in, tk=512, compute_dtype=jnp.bfloat16):
    """One-time weight prep (transpose / pad / cast), hoisted out of the forward."""
    assert tk % 128 == 0, "K tile must be a multiple of 128 lanes"
    w1, b1, w2, b2 = params["w1"], params["b1"], params["w2"], params["b2"]
    hid, d_out = w1.shape[0], w2.shape[0]
    k_p = _round_up(d_in, tk)
    hid_p = _round_up(hid, 128)                    # lane-dense hidden
    d_out_p = _round_up(d_out, 128)                # lane-dense output
    w1_t = jnp.pad(w1.T.astype(compute_dtype),
                   ((0, k_p - d_in), (0, hid_p - hid)))
    w2_t = jnp.pad(w2.T.astype(compute_dtype),
                   ((0, hid_p - hid), (0, d_out_p - d_out)))
    b1_2d = jnp.pad(b1.astype(jnp.float32).reshape(1, hid),
                    ((0, 0), (0, hid_p - hid)))
    b2_2d = jnp.pad(b2.astype(jnp.float32).reshape(1, d_out),
                    ((0, 0), (0, d_out_p - d_out)))
    return {
        "w1_t": w1_t, "b1": b1_2d, "w2_t": w2_t, "b2": b2_2d,
        "d_in": d_in, "d_out": d_out, "hid_p": hid_p,
        "k_p": k_p, "d_out_p": d_out_p, "tk": tk,
        "compute_dtype": compute_dtype,
    }


def mtp_forward(image, agent_state_vector, prepared, *, num_modes, training=True):
    """Pallas implementation of MTP.forward (flatten backbone)."""
    B = image.shape[0]
    # Backbone: flatten NCHW -> (B, C*H*W)   (glue, plain JAX)
    backbone_out = image.reshape(B, -1)
    x = jnp.concatenate([backbone_out, agent_state_vector], axis=1)

    d_in, d_out = prepared["d_in"], prepared["d_out"]
    hid_p, k_p, d_out_p, tk = (prepared["hid_p"], prepared["k_p"],
                               prepared["d_out_p"], prepared["tk"])
    compute_dtype = prepared["compute_dtype"]
    assert x.shape[1] == d_in

    b_p = _round_up(max(B, 8), 8)                 # full sublane group
    x_p = jnp.pad(x, ((0, b_p - B), (0, k_p - d_in))).astype(compute_dtype)

    w1_t, b1, w2_t, b2 = (prepared["w1_t"], prepared["b1"],
                          prepared["w2_t"], prepared["b2"])

    kernel = functools.partial(
        _mtp_kernel, num_modes=num_modes, d_out=d_out,
        apply_softmax=not training, compute_dtype=compute_dtype)

    n_k = k_p // tk
    itemsize = jnp.dtype(compute_dtype).itemsize
    # Rough VMEM budget: double-buffered x/w1 tiles + resident w2/b1/b2/out/acc.
    vmem_need = (2 * (b_p * tk + tk * hid_p) * itemsize
                 + hid_p * d_out_p * itemsize
                 + (hid_p + d_out_p) * 4
                 + 2 * b_p * d_out_p * 4
                 + b_p * hid_p * 4)
    vmem_limit = int(min(max(2 * vmem_need, 32 * 1024 * 1024),
                         64 * 1024 * 1024))

    cost = pl.CostEstimate(
        flops=2 * b_p * (k_p * hid_p + hid_p * d_out_p),
        transcendentals=(b_p * d_out_p if not training else 0),
        bytes_accessed=(x_p.size * itemsize
                        + w1_t.size * itemsize + w2_t.size * itemsize
                        + b1.size * 4 + b2.size * 4
                        + b_p * d_out_p * 4),
    )

    out = pl.pallas_call(
        kernel,
        out_shape=jax.ShapeDtypeStruct((b_p, d_out_p), jnp.float32),
        grid_spec=pltpu.PrefetchScalarGridSpec(
            num_scalar_prefetch=0,
            grid=(n_k,),
            in_specs=[
                pl.BlockSpec((b_p, tk), lambda k: (0, k)),          # x K-tile
                pl.BlockSpec((tk, hid_p), lambda k: (k, 0)),        # w1 K-tile
                pl.BlockSpec((1, hid_p), lambda k: (0, 0)),         # b1 (resident)
                pl.BlockSpec((hid_p, d_out_p), lambda k: (0, 0)),   # w2 (resident)
                pl.BlockSpec((1, d_out_p), lambda k: (0, 0)),       # b2 (resident)
            ],
            out_specs=pl.BlockSpec((b_p, d_out_p), lambda k: (0, 0)),
            scratch_shapes=[pltpu.VMEM((b_p, hid_p), jnp.float32)],
        ),
        compiler_params=pltpu.CompilerParams(
            dimension_semantics=("arbitrary",),     # K is a reduction axis
            vmem_limit_bytes=vmem_limit,
        ),
        cost_estimate=cost,
    )(x_p, w1_t, b1, w2_t, b2)

    return out[:B, :d_out]


def mtp_reference(image, agent_state_vector, params, *, num_modes, training=True,
                  compute_dtype=jnp.float32):
    """Plain-JAX reference mirroring the PyTorch forward (optionally bf16 weights)."""
    B = image.shape[0]
    backbone_out = image.reshape(B, -1)
    x = jnp.concatenate([backbone_out, agent_state_vector], axis=1)
    w1 = params["w1"].astype(compute_dtype)
    w2 = params["w2"].astype(compute_dtype)
    h = jnp.dot(x.astype(compute_dtype), w1.T,
                preferred_element_type=jnp.float32) + params["b1"]
    fc2 = jnp.dot(h.astype(compute_dtype), w2.T,
                  preferred_element_type=jnp.float32) + params["b2"]
    probs = fc2[:, -num_modes:]
    traj = fc2[:, :-num_modes]
    if not training:
        probs = jax.nn.softmax(probs, axis=-1)
    return jnp.concatenate([traj, probs], axis=1)


if __name__ == "__main__":
    # Small shapes consistent with the module:
    #   image (B, C, H, W) = (2, 3, 16, 16), agent_state_vector (B, 3)
    #   seconds=6, Hz=2 -> H=12 ; num_modes=3 -> D_out = 3*(2*12+1) = 75
    #   n_hidden_layers = 128 (scaled down from 4096)
    B, C, Hs, Ws = 2, 3, 16, 16
    num_modes, seconds, hz = 3, 6, 2
    n_hidden = 128
    backbone_feature_dim = C * Hs * Ws
    d_in = backbone_feature_dim + ASV_DIM          # 771
    d_out = num_modes * (2 * seconds * hz + 1)     # 75

    key = jax.random.PRNGKey(0)
    k_img, k_asv, k_w1, k_b1, k_w2, k_b2 = jax.random.split(key, 6)

    image = jax.random.normal(k_img, (B, C, Hs, Ws), dtype=jnp.float32)
    asv = jax.random.normal(k_asv, (B, ASV_DIM), dtype=jnp.float32)

    # PyTorch Linear weight shape = (out_features, in_features).
    params = {
        "w1": jax.random.normal(k_w1, (n_hidden, d_in), dtype=jnp.float32) * 0.02,
        "b1": jax.random.normal(k_b1, (n_hidden,), dtype=jnp.float32) * 0.02,
        "w2": jax.random.normal(k_w2, (d_out, n_hidden), dtype=jnp.float32) * 0.02,
        "b2": jax.random.normal(k_b2, (d_out,), dtype=jnp.float32) * 0.02,
    }

    # ---- f32 path: exact check against the f32 reference --------------------
    prep_f32 = prepare_mtp_params(params, d_in=d_in, tk=512,
                                  compute_dtype=jnp.float32)

    out_train = mtp_forward(image, asv, prep_f32, num_modes=num_modes,
                            training=True)
    jax.block_until_ready(out_train)
    ref_train = mtp_reference(image, asv, params, num_modes=num_modes,
                              training=True)
    assert jnp.allclose(out_train, ref_train, rtol=1e-4, atol=1e-4)

    out_eval = mtp_forward(image, asv, prep_f32, num_modes=num_modes,
                           training=False)
    jax.block_until_ready(out_eval)
    ref_eval = mtp_reference(image, asv, params, num_modes=num_modes,
                             training=False)
    # approx reciprocal in the in-kernel softmax -> slightly looser tolerance
    assert jnp.allclose(out_eval, ref_eval, rtol=2e-3, atol=2e-3)

    # ---- bf16 weight-streaming path (perf config) ----------------------------
    prep_bf16 = prepare_mtp_params(params, d_in=d_in, tk=512,
                                   compute_dtype=jnp.bfloat16)
    out_bf16 = mtp_forward(image, asv, prep_bf16, num_modes=num_modes,
                           training=False)
    jax.block_until_ready(out_bf16)
    ref_bf16 = mtp_reference(image, asv, params, num_modes=num_modes,
                             training=False, compute_dtype=jnp.bfloat16)
    assert jnp.allclose(out_bf16, ref_bf16, rtol=2e-2, atol=2e-2)

    print("KERNEL_OK")
</pallas_src>

<mosaic_0001>
module attributes {stable_mosaic.version = 11 : i64} {
  func.func @_mtp_kernel(%arg0: i32, %arg1: memref<8x512xf32, #tpu.memory_space<vmem>>, %arg2: memref<512x128xf32, #tpu.memory_space<vmem>>, %arg3: memref<1x128xf32, #tpu.memory_space<vmem>>, %arg4: memref<128x128xf32, #tpu.memory_space<vmem>>, %arg5: memref<1x128xf32, #tpu.memory_space<vmem>>, %arg6: memref<8x128xf32, #tpu.memory_space<vmem>>, %arg7: memref<8x128xf32, #tpu.memory_space<vmem>>) attributes {dimension_semantics = [#tpu.dimension_semantics<arbitrary>], iteration_bounds = array<i64: 2>, scalar_prefetch = 0 : i64, scratch_operands = 1 : i64, tpu.core_type = #tpu.core_type<tc>, window_params = [{transform_indices = @transform_0, window_bounds = array<i64: 8, 512>}, {transform_indices = @transform_1, window_bounds = array<i64: 512, 128>}, {pipeline_mode = #tpu.pipeline_mode<synchronous>, transform_indices = @transform_2, window_bounds = array<i64: 1, 128>}, {pipeline_mode = #tpu.pipeline_mode<synchronous>, transform_indices = @transform_3, window_bounds = array<i64: 128, 128>}, {pipeline_mode = #tpu.pipeline_mode<synchronous>, transform_indices = @transform_4, window_bounds = array<i64: 1, 128>}, {pipeline_mode = #tpu.pipeline_mode<synchronous>, transform_indices = @transform_5, window_bounds = array<i64: 8, 128>}]} {
    %c0_i32 = arith.constant 0 : i32
    %0 = arith.cmpi eq, %arg0, %c0_i32 : i32
    %1 = arith.extui %0 : i1 to i32
    %c0_i32_0 = arith.constant 0 : i32
    %2 = arith.cmpi ne, %1, %c0_i32_0 : i32
    scf.if %2 {
      %c0_9 = arith.constant 0 : index
      %c0_10 = arith.constant 0 : index
      %12 = vector.load %arg3[%c0_9, %c0_10] : memref<1x128xf32, #tpu.memory_space<vmem>>, vector<1x128xf32>
      %13 = vector.shape_cast %12 : vector<1x128xf32> to vector<1x128xf32>
      %14 = vector.broadcast %13 : vector<1x128xf32> to vector<8x128xf32>
      %c0_11 = arith.constant 0 : index
      %c0_12 = arith.constant 0 : index
      %15 = vector.load %arg7[%c0_11, %c0_12] : memref<8x128xf32, #tpu.memory_space<vmem>>, vector<8x128xf32>
      tpu.vector_store %arg7[%c0_11, %c0_12], %14 {strides = array<i32>} : memref<8x128xf32, #tpu.memory_space<vmem>>, vector<8x128xf32>,
    } else {
    }
    %c0 = arith.constant 0 : index
    %c0_1 = arith.constant 0 : index
    %3 = vector.load %arg7[%c0, %c0_1] : memref<8x128xf32, #tpu.memory_space<vmem>>, vector<8x128xf32>
    %c0_2 = arith.constant 0 : index
    %c0_3 = arith.constant 0 : index
    %4 = vector.load %arg1[%c0_2, %c0_3] : memref<8x512xf32, #tpu.memory_space<vmem>>, vector<8x512xf32>
    %c0_4 = arith.constant 0 : index
    %c0_5 = arith.constant 0 : index
    %5 = vector.load %arg2[%c0_4, %c0_5] : memref<512x128xf32, #tpu.memory_space<vmem>>, vector<512x128xf32>
    %cst = arith.constant dense<0.000000e+00> : vector<8x128xf32>
    %6 = tpu.matmul %4, %5, %cst {dimension_numbers = #tpu.dot_dimension_numbers<[1], [0], [0], [1], [0, 0, 1, 1], [], []>} : vector<8x512xf32>, vector<512x128xf32>, vector<8x128xf32> -> vector<8x128xf32>
    %7 = arith.addf %3, %6 : vector<8x128xf32>
    %c0_6 = arith.constant 0 : index
    %c0_7 = arith.constant 0 : index
    %8 = vector.load %arg7[%c0_6, %c0_7] : memref<8x128xf32, #tpu.memory_space<vmem>>, vector<8x128xf32>
    tpu.vector_store %arg7[%c0_6, %c0_7], %7 {strides = array<i32>} : memref<8x128xf32, #tpu.memory_space<vmem>>, vector<8x128xf32>,
    %c1_i32 = arith.constant 1 : i32
    %9 = arith.cmpi eq, %arg0, %c1_i32 : i32
    %10 = arith.extui %9 : i1 to i32
    %c0_i32_8 = arith.constant 0 : i32
    %11 = arith.cmpi ne, %10, %c0_i32_8 : i32
    scf.if %11 {
      %c0_9 = arith.constant 0 : index
      %c0_10 = arith.constant 0 : index
      %12 = vector.load %arg7[%c0_9, %c0_10] : memref<8x128xf32, #tpu.memory_space<vmem>>, vector<8x128xf32>
      %c0_11 = arith.constant 0 : index
      %c0_12 = arith.constant 0 : index
      %13 = vector.load %arg4[%c0_11, %c0_12] : memref<128x128xf32, #tpu.memory_space<vmem>>, vector<128x128xf32>
      %cst_13 = arith.constant dense<0.000000e+00> : vector<8x128xf32>
      %14 = tpu.matmul %12, %13, %cst_13 {dimension_numbers = #tpu.dot_dimension_numbers<[1], [0], [0], [1], [0, 0, 1, 1], [], []>} : vector<8x128xf32>, vector<128x128xf32>, vector<8x128xf32> -> vector<8x128xf32>
      %c0_14 = arith.constant 0 : index
      %c0_15 = arith.constant 0 : index
      %15 = vector.load %arg5[%c0_14, %c0_15] : memref<1x128xf32, #tpu.memory_space<vmem>>, vector<1x128xf32>
      %16 = vector.broadcast %15 : vector<1x128xf32> to vector<8x128xf32>
      %17 = arith.addf %14, %16 : vector<8x128xf32>
      %c0_16 = arith.constant 0 : index
      %c0_17 = arith.constant 0 : index
      %18 = vector.load %arg6[%c0_16, %c0_17] : memref<8x128xf32, #tpu.memory_space<vmem>>, vector<8x128xf32>
      tpu.vector_store %arg6[%c0_16, %c0_17], %17 {strides = array<i32>} : memref<8x128xf32, #tpu.memory_space<vmem>>, vector<8x128xf32>,
    } else {
    }
    return
  }
  func.func @transform_0(%arg0: i32) -> (i32, i32) {
    %c0_i32 = arith.constant 0 : i32
    %c0_i32_0 = arith.constant 0 : i32
    return %c0_i32, %arg0 : i32, i32
  }
  func.func @transform_1(%arg0: i32) -> (i32, i32) {
    %c0_i32 = arith.constant 0 : i32
    %c0_i32_0 = arith.constant 0 : i32
    return %arg0, %c0_i32 : i32, i32
  }
  func.func @transform_2(%arg0: i32) -> (i32, i32) {
    %c0_i32 = arith.constant 0 : i32
    %c0_i32_0 = arith.constant 0 : i32
    %c0_i32_1 = arith.constant 0 : i32
    return %c0_i32, %c0_i32_0 : i32, i32
  }
  func.func @transform_3(%arg0: i32) -> (i32, i32) {
    %c0_i32 = arith.constant 0 : i32
    %c0_i32_0 = arith.constant 0 : i32
    %c0_i32_1 = arith.constant 0 : i32
    return %c0_i32, %c0_i32_0 : i32, i32
  }
  func.func @transform_4(%arg0: i32) -> (i32, i32) {
    %c0_i32 = arith.constant 0 : i32
    %c0_i32_0 = arith.constant 0 : i32
    %c0_i32_1 = arith.constant 0 : i32
    return %c0_i32, %c0_i32_0 : i32, i32
  }
  func.func @transform_5(%arg0: i32) -> (i32, i32) {
    %c0_i32 = arith.constant 0 : i32
    %c0_i32_0 = arith.constant 0 : i32
    %c0_i32_1 = arith.constant 0 : i32
    return %c0_i32, %c0_i32_0 : i32, i32
  }
}

</mosaic_0001>

<llo_original>
// kernel: tpu_custom_call.1
$region0: #{tpu_custom_call.1}
  #allocation0 [shape = 'u32[]', space=smem, size = 0x4, offset = 0x4, fixed_abs, tag = 'smem constant byte address 0x4 - core index']
  #allocation1 [shape = 'u32[144,128]{1,0:T(1,128)}', space=vmem, size = 0x12000, scoped, tag = 'internal scratch']
  #allocation2 [shape = 'f32[8,128]{1,0:T(8,128)}', space=vmem, size = 0x1000, scoped, tag = 'scratch operand']
  %s0 = inlined_call_operand.hbm [shape: f32[8,1024], index: 0, kind: input, shape index: {}]
  %s1 = inlined_call_operand.hbm [shape: f32[1024,128], index: 1, kind: input, shape index: {}]
  %s2 = inlined_call_operand.vmem [shape: f32[1,128], index: 2, kind: input, shape index: {}]
  %s3 = inlined_call_operand.hbm [shape: f32[128,128], index: 3, kind: input, shape index: {}]
  %s4 = inlined_call_operand.vmem [shape: f32[1,128], index: 4, kind: input, shape index: {}]
  %s5 = inlined_call_operand.hbm [shape: f32[8,128], index: 5, kind: output, shape index: {}]
  %s6 = sld [smem:[#allocation0]]
  $region73: #{tpu_custom_call.1} parent=0
    _
  %s8 = ssub.s32 1, %s6
  %s9 = scalar_select 0, %s8, %s6
  $region1: #{tpu_custom_call.1} parent=0
    #allocation3 [shape = 'u8[32768]{0}', space=vmem, size = 0x8000, scoped, tag = 'input window, operand 0']
    #allocation4 [shape = 's32[2]{0}', space=sflag, size = 0x8, scoped, tag = 'scoped memory for tpu_custom_call.1']
    #allocation5 [shape = 's32[2]{0}', space=sflag, size = 0x8, scoped, tag = 'scoped memory for tpu_custom_call.1']
    #allocation6 [shape = 'u8[524288]{0}', space=vmem, size = 0x80000, scoped, tag = 'input window, operand 1']
    #allocation7 [shape = 's32[2]{0}', space=sflag, size = 0x8, scoped, tag = 'scoped memory for tpu_custom_call.1']
    #allocation8 [shape = 'u8[65536]{0}', space=vmem, size = 0x10000, scoped, tag = 'input window, operand 3, single buffered']
    #allocation9 [shape = 'u8[4096]{0}', space=vmem, size = 0x1000, scoped, tag = 'output window, operand 0, single buffered']
    %10 = vsyncpa [#allocation4], 0
    %s11 = scalar_lea.sflag [#allocation4], 1
    %12 = vsyncpa %s11, 0
    %13 = vsyncpa [#allocation7], 0
    %s14 = scalar_lea.sflag [#allocation7], 1
    %15 = vsyncpa %s14, 0
    %16 = vsyncpa [#allocation5], 0
    loop: start=0, step=1, limit=4
    $region2: #{tpu_custom_call.1} parent=1 // loop_pre_header
      _
    $region3: #{tpu_custom_call.1} parent=1 // loop_header
      %s18 = sphi 0, %s22
      %p19 = scmp.ge.s32.totalorder %s18, 4
      %s28 = sphi 0, %s30
      %s31 = sphi 0, %s28
      %s32 = sphi 0, %s31
      %s48 = sphi 0, %s32
      %s54 = sphi 0, %s56
      %s57 = sphi 0, %s54
      %s58 = sphi 0, %s57
      %s74 = sphi 0, %s58
      %s78 = sphi 0, %s78
      %s80 = sphi 0, %s78
      %s81 = sphi 0, %s80
      %s95 = sphi 0, %s81
      %s99 = sphi 0, %s99
      %s101 = sphi 0, %s99
      %s102 = sphi 0, %s101
      %s116 = sphi 0, %s102
      %s120 = sphi 0, %s120
      %s122 = sphi 0, %s120
      %s123 = sphi 0, %s122
      %s137 = sphi 0, %s123
      %s141 = sphi 0, %s141
      %s143 = sphi 0, %s141
      %s144 = sphi 0, %s143
      %s158 = sphi 0, %s144
    $region4: #{tpu_custom_call.1} parent=1 // loop_header_branch
      %21 = sbr.rel (%p19) target = $region8
    $region5: #{tpu_custom_call.1} parent=1 // loop_body
      %s23 = ssub.s32 %s18, 1
      %s24 = ssub.s32 %s18, 2
      %s25 = sadd.s32 %s18, 1
      %s26 = ssub.s32 %s18, %s25
      %p27 = scmp.eq.s32.totalorder %s26, 0
      %s29 = sadd.s32 %s28, 1
      %s30 = scalar_select %p27, %s28, %s29
      %p33 = pneg %p27
      %p34 = scmp.eq.s32.totalorder %s18, 1
      %p35 = por %p33, %p34
      %p36 = scmp.ne.s32.totalorder %s28, %s31
      %p37 = scmp.eq.s32.totalorder %s18, 0
      %p38 = por %p36, %p37
      %p39 = scmp.ne.s32.totalorder %s28, %s31
      %p40 = scmp.eq.s32.totalorder %s23, 1
      %p41 = por %p39, %p40
      %p42 = scmp.ne.s32.totalorder %s31, %s32
      %p43 = scmp.eq.s32.totalorder %s23, 0
      %p44 = por %p42, %p43
      %p45 = scmp.ne.s32.totalorder %s31, %s32
      %p46 = scmp.eq.s32.totalorder %s24, 1
      %p47 = por %p45, %p46
      %p49 = scmp.ne.s32.totalorder %s32, %s48
      %p50 = scmp.eq.s32.totalorder %s24, 0
      %p51 = por %p49, %p50
      %s52 = ssub.s32 %s18, %s25
      %p53 = scmp.eq.s32.totalorder %s52, 0
      %s55 = sadd.s32 %s54, 1
      %s56 = scalar_select %p53, %s54, %s55
      %p59 = pneg %p53
      %p60 = scmp.eq.s32.totalorder %s18, 1
      %p61 = por %p59, %p60
      %p62 = scmp.ne.s32.totalorder %s54, %s57
      %p63 = scmp.eq.s32.totalorder %s18, 0
      %p64 = por %p62, %p63
      %p65 = scmp.ne.s32.totalorder %s54, %s57
      %p66 = scmp.eq.s32.totalorder %s23, 1
      %p67 = por %p65, %p66
      %p68 = scmp.ne.s32.totalorder %s57, %s58
      %p69 = scmp.eq.s32.totalorder %s23, 0
      %p70 = por %p68, %p69
      %p71 = scmp.ne.s32.totalorder %s57, %s58
      %p72 = scmp.eq.s32.totalorder %s24, 1
      %p73 = por %p71, %p72
      %p75 = scmp.ne.s32.totalorder %s58, %s74
      %p76 = scmp.eq.s32.totalorder %s24, 0
      %p77 = por %p75, %p76
      %s79 = sadd.s32 %s78, 1
      %p82 = scmp.eq.s32.totalorder %s18, 1
      %p83 = scmp.ne.s32.totalorder %s78, %s80
      %p84 = scmp.eq.s32.totalorder %s18, 0
      %p85 = por %p83, %p84
      %p86 = scmp.ne.s32.totalorder %s78, %s80
      %p87 = scmp.eq.s32.totalorder %s23, 1
      %p88 = por %p86, %p87
      %p89 = scmp.ne.s32.totalorder %s80, %s81
      %p90 = scmp.eq.s32.totalorder %s23, 0
      %p91 = por %p89, %p90
      %p92 = scmp.ne.s32.totalorder %s80, %s81
      %p93 = scmp.eq.s32.totalorder %s24, 1
      %p94 = por %p92, %p93
      %p96 = scmp.ne.s32.totalorder %s81, %s95
      %p97 = scmp.eq.s32.totalorder %s24, 0
      %p98 = por %p96, %p97
      %s100 = sadd.s32 %s99, 1
      %p103 = scmp.eq.s32.totalorder %s18, 1
      %p104 = scmp.ne.s32.totalorder %s99, %s101
      %p105 = scmp.eq.s32.totalorder %s18, 0
      %p106 = por %p104, %p105
      %p107 = scmp.ne.s32.totalorder %s99, %s101
      %p108 = scmp.eq.s32.totalorder %s23, 1
      %p109 = por %p107, %p108
      %p110 = scmp.ne.s32.totalorder %s101, %s102
      %p111 = scmp.eq.s32.totalorder %s23, 0
      %p112 = por %p110, %p111
      %p113 = scmp.ne.s32.totalorder %s101, %s102
      %p114 = scmp.eq.s32.totalorder %s24, 1
      %p115 = por %p113, %p114
      %p117 = scmp.ne.s32.totalorder %s102, %s116
      %p118 = scmp.eq.s32.totalorder %s24, 0
      %p119 = por %p117, %p118
      %s121 = sadd.s32 %s120, 1
      %p124 = scmp.eq.s32.totalorder %s18, 1
      %p125 = scmp.ne.s32.totalorder %s120, %s122
      %p126 = scmp.eq.s32.totalorder %s18, 0
      %p127 = por %p125, %p126
      %p128 = scmp.ne.s32.totalorder %s120, %s122
      %p129 = scmp.eq.s32.totalorder %s23, 1
      %p130 = por %p128, %p129
      %p131 = scmp.ne.s32.totalorder %s122, %s123
      %p132 = scmp.eq.s32.totalorder %s23, 0
      %p133 = por %p131, %p132
      %p134 = scmp.ne.s32.totalorder %s122, %s123
      %p135 = scmp.eq.s32.totalorder %s24, 1
      %p136 = por %p134, %p135
      %p138 = scmp.ne.s32.totalorder %s123, %s137
      %p139 = scmp.eq.s32.totalorder %s24, 0
      %p140 = por %p138, %p139
      %s142 = sadd.s32 %s141, 1
      %p145 = scmp.eq.s32.totalorder %s18, 1
      %p146 = scmp.ne.s32.totalorder %s141, %s143
      %p147 = scmp.eq.s32.totalorder %s18, 0
      %p148 = por %p146, %p147
      %p149 = scmp.ne.s32.totalorder %s141, %s143
      %p150 = scmp.eq.s32.totalorder %s23, 1
      %p151 = por %p149, %p150
      %p152 = scmp.ne.s32.totalorder %s143, %s144
      %p153 = scmp.eq.s32.totalorder %s23, 0
      %p154 = por %p152, %p153
      %p155 = scmp.ne.s32.totalorder %s143, %s144
      %p156 = scmp.eq.s32.totalorder %s24, 1
      %p157 = por %p155, %p156
      %p159 = scmp.ne.s32.totalorder %s144, %s158
      %p160 = scmp.eq.s32.totalorder %s24, 0
      %p161 = por %p159, %p160
      %p162 = scmp.le.s32.totalorder 1, %s18
      %p163 = scmp.lt.s32.totalorder %s18, 3
      %p164 = pnand %p162, %p163
      %p165 = pneg %p164
      // Predicated region
      $region9: #{tpu_custom_call.1} parent=5 // pred_check
        _
      $region10: #{tpu_custom_call.1} parent=5 // pred_check_branch
        %167 = sbr.rel (%p164) target = $region12
      $region11: #{tpu_custom_call.1} parent=5 // pred_region
        %s168 = ssub.s32 %s18, 1
        // Predicated region
        $region13: #{tpu_custom_call.1} parent=11 // pred_check
          %p169 = pneg %p91
        $region14: #{tpu_custom_call.1} parent=11 // pred_check_branch
          %171 = sbr.rel (%p169) target = $region16
        $region15: #{tpu_custom_call.1} parent=11 // pred_region
          _
        $region16: #{tpu_custom_call.1} parent=11 // pred_fallthru
          _
        // Predicated region
        $region17: #{tpu_custom_call.1} parent=11 // pred_check
          %p172 = pneg %p112
        $region18: #{tpu_custom_call.1} parent=11 // pred_check_branch
          %174 = sbr.rel (%p172) target = $region20
        $region19: #{tpu_custom_call.1} parent=11 // pred_region
          %s176 = ssub.s32 2048, 2048
          %177 = vsyncadd [#allocation7], %s176
          %s178 = sshll.u32 [#allocation8], 4
          %s179 = int_to_ptr.vmem [resolvable:$true] %s178
          %184 = dma.hbm_to_vmem [thread:$0]  %s3, 2048, %s179, [#allocation7], 128, 128, 8
        $region20: #{tpu_custom_call.1} parent=11 // pred_fallthru
          _
        // Predicated region
        $region21: #{tpu_custom_call.1} parent=11 // pred_check
          %p185 = pneg %p133
        $region22: #{tpu_custom_call.1} parent=11 // pred_check_branch
          %187 = sbr.rel (%p185) target = $region24
        $region23: #{tpu_custom_call.1} parent=11 // pred_region
          _
        $region24: #{tpu_custom_call.1} parent=11 // pred_fallthru
          _
      $region12: #{tpu_custom_call.1} parent=5 // pred_fallthru
        _
      %p188 = scmp.lt.s32.totalorder %s18, 2
      // Predicated region
      $region25: #{tpu_custom_call.1} parent=5 // pred_check
        %p189 = pneg %p188
      $region26: #{tpu_custom_call.1} parent=5 // pred_check_branch
        %191 = sbr.rel (%p189) target = $region28
      $region27: #{tpu_custom_call.1} parent=5 // pred_region
        // Predicated region
        $region29: #{tpu_custom_call.1} parent=27 // pred_check
          %p192 = pneg %p38
        $region30: #{tpu_custom_call.1} parent=27 // pred_check_branch
          %194 = sbr.rel (%p192) target = $region32
        $region31: #{tpu_custom_call.1} parent=27 // pred_region
          %s195 = sand.u32 %s28, 1
          %s196 = scalar_lea.sflag [#allocation4], %s195
          %s197 = sand.u32 %s28, 1
          %s198 = smul.addr %s197, 32
          %s199 = scalar_lea.vmem [#allocation3], %s198
          %s200 = smul.u32 4, %s18
          %s202 = ssub.s32 512, 512
          %203 = vsyncadd %s196, %s202
          %s204 = smul.addr %s200, 128
          %s205 = scalar_lea.hbm %s0, %s204
          %s207 = sshll.u32 %s199, 4
          %s208 = int_to_ptr.vmem [resolvable:$true] %s207
          %210 = dma.hbm_to_vmem [thread:$0]  %s205, 512, %s208, %s196
        $region32: #{tpu_custom_call.1} parent=27 // pred_fallthru
          _
        // Predicated region
        $region33: #{tpu_custom_call.1} parent=27 // pred_check
          %p211 = pneg %p64
        $region34: #{tpu_custom_call.1} parent=27 // pred_check_branch
          %213 = sbr.rel (%p211) target = $region36
        $region35: #{tpu_custom_call.1} parent=27 // pred_region
          %s214 = sand.u32 %s18, 1
          %s215 = scalar_lea.sflag [#allocation7], %s214
          %s216 = sand.u32 %s54, 1
          %s217 = smul.addr %s216, 512
          %s218 = scalar_lea.vmem [#allocation6], %s217
          %s219 = smul.u32 64, %s18
          %s221 = ssub.s32 8192, 8192
          %222 = vsyncadd %s215, %s221
          %s223 = smul.addr %s219, 128
          %s224 = scalar_lea.hbm %s1, %s223
          %s225 = sshll.u32 %s218, 4
          %s226 = int_to_ptr.vmem [resolvable:$true] %s225
          %231 = dma.hbm_to_vmem [thread:$0]  %s224, 8192, %s226, %s215, 128, 128, 8
        $region36: #{tpu_custom_call.1} parent=27 // pred_fallthru
          _
      $region28: #{tpu_custom_call.1} parent=5 // pred_fallthru
        _
      %p232 = scmp.le.s32.totalorder 1, %s18
      %p233 = scmp.lt.s32.totalorder %s18, 3
      %p234 = pnand %p232, %p233
      %p235 = pneg %p234
      // Predicated region
      $region37: #{tpu_custom_call.1} parent=5 // pred_check
        _
      $region38: #{tpu_custom_call.1} parent=5 // pred_check_branch
        %237 = sbr.rel (%p234) target = $region40
      $region39: #{tpu_custom_call.1} parent=5 // pred_region
        %s238 = ssub.s32 %s18, 1
        %s239 = sand.u32 %s31, 1
        %s240 = scalar_lea.sflag [#allocation4], %s239
        %s241 = sand.u32 %s31, 1
        %s242 = smul.addr %s241, 32
        %s243 = scalar_lea.vmem [#allocation3], %s242
        // Predicated region
        $region41: #{tpu_custom_call.1} parent=39 // pred_check
          %p244 = pneg %p44
        $region42: #{tpu_custom_call.1} parent=39 // pred_check_branch
          %246 = sbr.rel (%p244) target = $region44
        $region43: #{tpu_custom_call.1} parent=39 // pred_region
          %247 = dma.done %s240, 512
        $region44: #{tpu_custom_call.1} parent=39 // pred_fallthru
          _
        %s248 = sand.u32 %s23, 1
        %s249 = scalar_lea.sflag [#allocation7], %s248
        %s250 = sand.u32 %s57, 1
        %s251 = smul.addr %s250, 512
        %s252 = scalar_lea.vmem [#allocation6], %s251
        // Predicated region
        $region45: #{tpu_custom_call.1} parent=39 // pred_check
          %p253 = pneg %p70
        $region46: #{tpu_custom_call.1} parent=39 // pred_check_branch
          %255 = sbr.rel (%p253) target = $region48
        $region47: #{tpu_custom_call.1} parent=39 // pred_region
          %256 = dma.done %s249, 8192
        $region48: #{tpu_custom_call.1} parent=39 // pred_fallthru
          _
        // Predicated region
        $region49: #{tpu_custom_call.1} parent=39 // pred_check
          %p257 = pneg %p112
        $region50: #{tpu_custom_call.1} parent=39 // pred_check_branch
          %259 = sbr.rel (%p257) target = $region52
        $region51: #{tpu_custom_call.1} parent=39 // pred_region
          %260 = dma.done [#allocation7], 2048
        $region52: #{tpu_custom_call.1} parent=39 // pred_fallthru
          _
        %s261 = sand.u32 %s31, 1
        %s262 = scalar_lea.sflag [#allocation4], %s261
        %s263 = sand.u32 %s31, 1
        %s264 = smul.addr %s263, 32
        %s265 = scalar_lea.vmem [#allocation3], %s264
        %p266 = pneg %p44
        %p267 = pneg %p41
        %s268 = sand.u32 %s23, 1
        %s269 = scalar_lea.sflag [#allocation7], %s268
        %s270 = sand.u32 %s57, 1
        %s271 = smul.addr %s270, 512
        %s272 = scalar_lea.vmem [#allocation6], %s271
        %p273 = pneg %p70
        %p274 = pneg %p67
        %p275 = pneg %p91
        %p276 = pneg %p88
        %p277 = pneg %p112
        %p278 = pneg %p109
        %p279 = pneg %p133
        %p280 = pneg %p130
        %p281 = pneg %p154
        %p282 = pneg %p151
        %s283 = smul.u32 4, %s23
        %s284 = smul.u32 64, %s23
        %p285 = scmp.eq.s32.totalorder %s23, 0
        // Predicated region
        $region53: #{tpu_custom_call.1} parent=39 // pred_check
          %p286 = pneg %p285
        $region54: #{tpu_custom_call.1} parent=39 // pred_check_branch
          %288 = sbr.rel (%p286) target = $region56
        $region55: #{tpu_custom_call.1} parent=39 // pred_region
          %v289 = vld [vmem:[%s2] sm:$0x1]
          %v291 = vlaneseq
          %v292 = vshrl.u32 %v291, 7
          %v293 = vsub.s32 0, %v292
          %v294 = vrot.slane %v289, %v293
          %296 = vst [vmem:[#allocation2] sm:$0xff] %v294
        $region56: #{tpu_custom_call.1} parent=39 // pred_fallthru
          _
        %v297 = vld [vmem:[#allocation2] sm:$0xff]
        %v298 = vld [vmem:[%s243] sm:$0xff]
        %v299 = vld [vmem:[%s243 + $0x8] sm:$0xff]
        %v300 = vld [vmem:[%s243 + $0x10] sm:$0xff]
        %v301 = vld [vmem:[%s243 + $0x18] sm:$0xff]
        %v302 = vld [vmem:[%s252] sm:$0xff]
        %v303 = vld [vmem:[%s252 + $0x8] sm:$0xff]
        %v304 = vld [vmem:[%s252 + $0x10] sm:$0xff]
        %v305 = vld [vmem:[%s252 + $0x18] sm:$0xff]
        %v306 = vld [vmem:[%s252 + $0x20] sm:$0xff]
        %v307 = vld [vmem:[%s252 + $0x28] sm:$0xff]
        %v308 = vld [vmem:[%s252 + $0x30] sm:$0xff]
        %v309 = vld [vmem:[%s252 + $0x38] sm:$0xff]
        %v310 = vld [vmem:[%s252 + $0x40] sm:$0xff]
        %v311 = vld [vmem:[%s252 + $0x48] sm:$0xff]
        %v312 = vld [vmem:[%s252 + $0x50] sm:$0xff]
        %v313 = vld [vmem:[%s252 + $0x58] sm:$0xff]
        %v314 = vld [vmem:[%s252 + $0x60] sm:$0xff]
        %v315 = vld [vmem:[%s252 + $0x68] sm:$0xff]
        %v316 = vld [vmem:[%s252 + $0x70] sm:$0xff]
        %v317 = vld [vmem:[%s252 + $0x78] sm:$0xff]
        %v318 = vld [vmem:[%s252 + $0x80] sm:$0xff]
        %v319 = vld [vmem:[%s252 + $0x88] sm:$0xff]
        %v320 = vld [vmem:[%s252 + $0x90] sm:$0xff]
        %v321 = vld [vmem:[%s252 + $0x98] sm:$0xff]
        %v322 = vld [vmem:[%s252 + $0xa0] sm:$0xff]
        %v323 = vld [vmem:[%s252 + $0xa8] sm:$0xff]
        %v324 = vld [vmem:[%s252 + $0xb0] sm:$0xff]
        %v325 = vld [vmem:[%s252 + $0xb8] sm:$0xff]
        %v326 = vld [vmem:[%s252 + $0xc0] sm:$0xff]
        %v327 = vld [vmem:[%s252 + $0xc8] sm:$0xff]
        %v328 = vld [vmem:[%s252 + $0xd0] sm:$0xff]
        %v329 = vld [vmem:[%s252 + $0xd8] sm:$0xff]
        %v330 = vld [vmem:[%s252 + $0xe0] sm:$0xff]
        %v331 = vld [vmem:[%s252 + $0xe8] sm:$0xff]
        %v332 = vld [vmem:[%s252 + $0xf0] sm:$0xff]
        %v333 = vld [vmem:[%s252 + $0xf8] sm:$0xff]
        %v334 = vld [vmem:[%s252 + $0x100] sm:$0xff]
        %v335 = vld [vmem:[%s252 + $0x108] sm:$0xff]
        %v336 = vld [vmem:[%s252 + $0x110] sm:$0xff]
        %v337 = vld [vmem:[%s252 + $0x118] sm:$0xff]
        %v338 = vld [vmem:[%s252 + $0x120] sm:$0xff]
        %v339 = vld [vmem:[%s252 + $0x128] sm:$0xff]
        %v340 = vld [vmem:[%s252 + $0x130] sm:$0xff]
        %v341 = vld [vmem:[%s252 + $0x138] sm:$0xff]
        %v342 = vld [vmem:[%s252 + $0x140] sm:$0xff]
        %v343 = vld [vmem:[%s252 + $0x148] sm:$0xff]
        %v344 = vld [vmem:[%s252 + $0x150] sm:$0xff]
        %v345 = vld [vmem:[%s252 + $0x158] sm:$0xff]
        %v346 = vld [vmem:[%s252 + $0x160] sm:$0xff]
        %v347 = vld [vmem:[%s252 + $0x168] sm:$0xff]
        %v348 = vld [vmem:[%s252 + $0x170] sm:$0xff]
        %v349 = vld [vmem:[%s252 + $0x178] sm:$0xff]
        %v350 = vld [vmem:[%s252 + $0x180] sm:$0xff]
        %v351 = vld [vmem:[%s252 + $0x188] sm:$0xff]
        %v352 = vld [vmem:[%s252 + $0x190] sm:$0xff]
        %v353 = vld [vmem:[%s252 + $0x198] sm:$0xff]
        %v354 = vld [vmem:[%s252 + $0x1a0] sm:$0xff]
        %v355 = vld [vmem:[%s252 + $0x1a8] sm:$0xff]
        %v356 = vld [vmem:[%s252 + $0x1b0] sm:$0xff]
        %v357 = vld [vmem:[%s252 + $0x1b8] sm:$0xff]
        %v358 = vld [vmem:[%s252 + $0x1c0] sm:$0xff]
        %v359 = vld [vmem:[%s252 + $0x1c8] sm:$0xff]
        %v360 = vld [vmem:[%s252 + $0x1d0] sm:$0xff]
        %v361 = vld [vmem:[%s252 + $0x1d8] sm:$0xff]
        %v362 = vld [vmem:[%s252 + $0x1e0] sm:$0xff]
        %v363 = vld [vmem:[%s252 + $0x1e8] sm:$0xff]
        %v364 = vld [vmem:[%s252 + $0x1f0] sm:$0xff]
        %v365 = vld [vmem:[%s252 + $0x1f8] sm:$0xff]
        %366 = vmatprep.subr.mxu0 0.0
        %367 = vmatpush1.msra.mxu0 %v302
        %368 = vmatprep.subr.mxu0 0.0
        %369 = vmatpush1.msra.mxu0 %v303
        %370 = vmatprep.subr.mxu0 0.0
        %371 = vmatpush1.msra.mxu0 %v304
        %372 = vmatprep.subr.mxu0 0.0
        %373 = vmatpush1.msra.mxu0 %v305
        %374 = vmatprep.subr.mxu0 0.0
        %375 = vmatpush1.msra.mxu0 %v306
        %376 = vmatprep.subr.mxu0 0.0
        %377 = vmatpush1.msra.mxu0 %v307
        %378 = vmatprep.subr.mxu0 0.0
        %379 = vmatpush1.msra.mxu0 %v308
        %380 = vmatprep.subr.mxu0 0.0
        %381 = vmatpush1.msra.mxu0 %v309
        %382 = vmatprep.subr.mxu0 0.0
        %383 = vmatpush1.msra.mxu0 %v310
        %384 = vmatprep.subr.mxu0 0.0
        %385 = vmatpush1.msra.mxu0 %v311
        %386 = vmatprep.subr.mxu0 0.0
        %387 = vmatpush1.msra.mxu0 %v312
        %388 = vmatprep.subr.mxu0 0.0
        %389 = vmatpush1.msra.mxu0 %v313
        %390 = vmatprep.subr.mxu0 0.0
        %391 = vmatpush1.msra.mxu0 %v314
        %392 = vmatprep.subr.mxu0 0.0
        %393 = vmatpush1.msra.mxu0 %v315
        %394 = vmatprep.subr.mxu0 0.0
        %395 = vmatpush1.msra.mxu0 %v316
        %396 = vmatprep.subr.mxu0 0.0
        %397 = vmatpush1.msra.mxu0 %v317
        %398 = vmatprep.subr.mxu0 0.0
        %399 = vmatpush1.msra.mxu0 %v318
        %400 = vmatprep.subr.mxu0 0.0
        %401 = vmatpush1.msra.mxu0 %v319
        %402 = vmatprep.subr.mxu0 0.0
        %403 = vmatpush1.msra.mxu0 %v320
        %404 = vmatprep.subr.mxu0 0.0
        %405 = vmatpush1.msra.mxu0 %v321
        %406 = vmatprep.subr.mxu0 0.0
        %407 = vmatpush1.msra.mxu0 %v322
        %408 = vmatprep.subr.mxu0 0.0
        %409 = vmatpush1.msra.mxu0 %v323
        %410 = vmatprep.subr.mxu0 0.0
        %411 = vmatpush1.msra.mxu0 %v324
        %412 = vmatprep.subr.mxu0 0.0
        %413 = vmatpush1.msra.mxu0 %v325
        %414 = vmatprep.subr.mxu0 0.0
        %415 = vmatpush1.msra.mxu0 %v326
        %416 = vmatprep.subr.mxu0 0.0
        %417 = vmatpush1.msra.mxu0 %v327
        %418 = vmatprep.subr.mxu0 0.0
        %419 = vmatpush1.msra.mxu0 %v328
        %420 = vmatprep.subr.mxu0 0.0
        %421 = vmatpush1.msra.mxu0 %v329
        %422 = vmatprep.subr.mxu0 0.0
        %423 = vmatpush1.msra.mxu0 %v330
        %424 = vmatprep.subr.mxu0 0.0
        %425 = vmatpush1.msra.mxu0 %v331
        %426 = vmatprep.subr.mxu0 0.0
        %427 = vmatpush1.msra.mxu0 %v332
        %428 = vmatprep.subr.mxu0 0.0
        %429 = vmatpush1.msra.mxu0 %v333
        %430 = vmatprep.mubr.f32.mxu0 %v299
        %431 = vmatmul.mubr.f32.gmra.mrb[0].mxu0 %v298
        %v432 = vpop.f32.mrb[0].mxu0
        %v433 = vadd.f32 0.0, %v432
        %v434 = vpop.f32.mrb[0].mxu0
        %435 = vdwg.mxu0
        %436 = vmatprep.subr.mxu0 0.0
        %437 = vmatpush1.msra.mxu0 %v334
        %438 = vmatprep.subr.mxu0 0.0
        %439 = vmatpush1.msra.mxu0 %v335
        %440 = vmatprep.subr.mxu0 0.0
        %441 = vmatpush1.msra.mxu0 %v336
        %442 = vmatprep.subr.mxu0 0.0
        %443 = vmatpush1.msra.mxu0 %v337
        %444 = vmatprep.subr.mxu0 0.0
        %445 = vmatpush1.msra.mxu0 %v338
        %446 = vmatprep.subr.mxu0 0.0
        %447 = vmatpush1.msra.mxu0 %v339
        %448 = vmatprep.subr.mxu0 0.0
        %449 = vmatpush1.msra.mxu0 %v340
        %450 = vmatprep.subr.mxu0 0.0
        %451 = vmatpush1.msra.mxu0 %v341
        %452 = vmatprep.subr.mxu0 0.0
        %453 = vmatpush1.msra.mxu0 %v342
        %454 = vmatprep.subr.mxu0 0.0
        %455 = vmatpush1.msra.mxu0 %v343
        %456 = vmatprep.subr.mxu0 0.0
        %457 = vmatpush1.msra.mxu0 %v344
        %458 = vmatprep.subr.mxu0 0.0
        %459 = vmatpush1.msra.mxu0 %v345
        %460 = vmatprep.subr.mxu0 0.0
        %461 = vmatpush1.msra.mxu0 %v346
        %462 = vmatprep.subr.mxu0 0.0
        %463 = vmatpush1.msra.mxu0 %v347
        %464 = vmatprep.subr.mxu0 0.0
        %465 = vmatpush1.msra.mxu0 %v348
        %466 = vmatprep.subr.mxu0 0.0
        %467 = vmatpush1.msra.mxu0 %v349
        %468 = vmatprep.subr.mxu0 0.0
        %469 = vmatpush1.msra.mxu0 %v350
        %470 = vmatprep.subr.mxu0 0.0
        %471 = vmatpush1.msra.mxu0 %v351
        %472 = vmatprep.subr.mxu0 0.0
        %473 = vmatpush1.msra.mxu0 %v352
        %474 = vmatprep.subr.mxu0 0.0
        %475 = vmatpush1.msra.mxu0 %v353
        %476 = vmatprep.subr.mxu0 0.0
        %477 = vmatpush1.msra.mxu0 %v354
        %478 = vmatprep.subr.mxu0 0.0
        %479 = vmatpush1.msra.mxu0 %v355
        %480 = vmatprep.subr.mxu0 0.0
        %481 = vmatpush1.msra.mxu0 %v356
        %482 = vmatprep.subr.mxu0 0.0
        %483 = vmatpush1.msra.mxu0 %v357
        %484 = vmatprep.subr.mxu0 0.0
        %485 = vmatpush1.msra.mxu0 %v358
        %486 = vmatprep.subr.mxu0 0.0
        %487 = vmatpush1.msra.mxu0 %v359
        %488 = vmatprep.subr.mxu0 0.0
        %489 = vmatpush1.msra.mxu0 %v360
        %490 = vmatprep.subr.mxu0 0.0
        %491 = vmatpush1.msra.mxu0 %v361
        %492 = vmatprep.subr.mxu0 0.0
        %493 = vmatpush1.msra.mxu0 %v362
        %494 = vmatprep.subr.mxu0 0.0
        %495 = vmatpush1.msra.mxu0 %v363
        %496 = vmatprep.subr.mxu0 0.0
        %497 = vmatpush1.msra.mxu0 %v364
        %498 = vmatprep.subr.mxu0 0.0
        %499 = vmatpush1.msra.mxu0 %v365
        %500 = vmatprep.mubr.f32.mxu0 %v301
        %501 = vmatmul.mubr.f32.gmra.mrb[0].mxu0 %v300
        %v502 = vpop.f32.mrb[0].mxu0
        %v503 = vadd.f32 %v433, %v502
        %v504 = vpop.f32.mrb[0].mxu0
        %505 = vdwg.mxu0
        %v506 = vadd.f32 %v297, %v503
        %507 = vst [vmem:[#allocation2] sm:$0xff] %v506
        %p508 = scmp.eq.s32.totalorder %s23, 1
        // Predicated region
        $region57: #{tpu_custom_call.1} parent=39 // pred_check
          %p509 = pneg %p508
        $region58: #{tpu_custom_call.1} parent=39 // pred_check_branch
          %511 = sbr.rel (%p509) target = $region60
        $region59: #{tpu_custom_call.1} parent=39 // pred_region
          %v512 = vld [vmem:[#allocation2] sm:$0xff]
          %v513 = vld [vmem:[#allocation8] sm:$0xff]
          %v514 = vld [vmem:[#allocation8 + $0x8] sm:$0xff]
          %v515 = vld [vmem:[#allocation8 + $0x10] sm:$0xff]
          %v516 = vld [vmem:[#allocation8 + $0x18] sm:$0xff]
          %v517 = vld [vmem:[#allocation8 + $0x20] sm:$0xff]
          %v518 = vld [vmem:[#allocation8 + $0x28] sm:$0xff]
          %v519 = vld [vmem:[#allocation8 + $0x30] sm:$0xff]
          %v520 = vld [vmem:[#allocation8 + $0x38] sm:$0xff]
          %v521 = vld [vmem:[#allocation8 + $0x40] sm:$0xff]
          %v522 = vld [vmem:[#allocation8 + $0x48] sm:$0xff]
          %v523 = vld [vmem:[#allocation8 + $0x50] sm:$0xff]
          %v524 = vld [vmem:[#allocation8 + $0x58] sm:$0xff]
          %v525 = vld [vmem:[#allocation8 + $0x60] sm:$0xff]
          %v526 = vld [vmem:[#allocation8 + $0x68] sm:$0xff]
          %v527 = vld [vmem:[#allocation8 + $0x70] sm:$0xff]
          %v528 = vld [vmem:[#allocation8 + $0x78] sm:$0xff]
          %v529 = vld [vmem:[%s4] sm:$0x1]
          %v531 = vlaneseq
          %v532 = vshrl.u32 %v531, 7
          %v533 = vsub.s32 0, %v532
          %v534 = vrot.slane %v529, %v533
          %536 = vmatprep.subr.mxu0 0.0
          %537 = vmatpush1.msra.mxu0 %v513
          %538 = vmatprep.subr.mxu0 0.0
          %539 = vmatpush1.msra.mxu0 %v514
          %540 = vmatprep.subr.mxu0 0.0
          %541 = vmatpush1.msra.mxu0 %v515
          %542 = vmatprep.subr.mxu0 0.0
          %543 = vmatpush1.msra.mxu0 %v516
          %544 = vmatprep.subr.mxu0 0.0
          %545 = vmatpush1.msra.mxu0 %v517
          %546 = vmatprep.subr.mxu0 0.0
          %547 = vmatpush1.msra.mxu0 %v518
          %548 = vmatprep.subr.mxu0 0.0
          %549 = vmatpush1.msra.mxu0 %v519
          %550 = vmatprep.subr.mxu0 0.0
          %551 = vmatpush1.msra.mxu0 %v520
          %552 = vmatprep.subr.mxu0 0.0
          %553 = vmatpush1.msra.mxu0 %v521
          %554 = vmatprep.subr.mxu0 0.0
          %555 = vmatpush1.msra.mxu0 %v522
          %556 = vmatprep.subr.mxu0 0.0
          %557 = vmatpush1.msra.mxu0 %v523
          %558 = vmatprep.subr.mxu0 0.0
          %559 = vmatpush1.msra.mxu0 %v524
          %560 = vmatprep.subr.mxu0 0.0
          %561 = vmatpush1.msra.mxu0 %v525
          %562 = vmatprep.subr.mxu0 0.0
          %563 = vmatpush1.msra.mxu0 %v526
          %564 = vmatprep.subr.mxu0 0.0
          %565 = vmatpush1.msra.mxu0 %v527
          %566 = vmatprep.subr.mxu0 0.0
          %567 = vmatpush1.msra.mxu0 %v528
          %568 = vmatprep.subr.mxu0 0.0
          %569 = vmatpush1.msra.mxu0 0.0
          %570 = vmatprep.subr.mxu0 0.0
          %571 = vmatpush1.msra.mxu0 0.0
          %572 = vmatprep.subr.mxu0 0.0
          %573 = vmatpush1.msra.mxu0 0.0
          %574 = vmatprep.subr.mxu0 0.0
          %575 = vmatpush1.msra.mxu0 0.0
          %576 = vmatprep.subr.mxu0 0.0
          %577 = vmatpush1.msra.mxu0 0.0
          %578 = vmatprep.subr.mxu0 0.0
          %579 = vmatpush1.msra.mxu0 0.0
          %580 = vmatprep.subr.mxu0 0.0
          %581 = vmatpush1.msra.mxu0 0.0
          %582 = vmatprep.subr.mxu0 0.0
          %583 = vmatpush1.msra.mxu0 0.0
          %584 = vmatprep.subr.mxu0 0.0
          %585 = vmatpush1.msra.mxu0 0.0
          %586 = vmatprep.subr.mxu0 0.0
          %587 = vmatpush1.msra.mxu0 0.0
          %588 = vmatprep.subr.mxu0 0.0
          %589 = vmatpush1.msra.mxu0 0.0
          %590 = vmatprep.subr.mxu0 0.0
          %591 = vmatpush1.msra.mxu0 0.0
          %592 = vmatprep.subr.mxu0 0.0
          %593 = vmatpush1.msra.mxu0 0.0
          %594 = vmatprep.subr.mxu0 0.0
          %595 = vmatpush1.msra.mxu0 0.0
          %596 = vmatprep.subr.mxu0 0.0
          %597 = vmatpush1.msra.mxu0 0.0
          %598 = vmatprep.subr.mxu0 0.0
          %599 = vmatpush1.msra.mxu0 0.0
          %600 = vmatprep.mubr.f32.mxu0 0.0
          %601 = vmatmul.mubr.f32.gmra.mrb[0].mxu0 %v512
          %v602 = vpop.f32.mrb[0].mxu0
          %v603 = vadd.f32 %v534, %v602
          %v604 = vpop.f32.mrb[0].mxu0
          %605 = vdwg.mxu0
          %606 = vst [vmem:[#allocation9] sm:$0xff] %v603
        $region60: #{tpu_custom_call.1} parent=39 // pred_fallthru
          _
        // Predicated region
        $region61: #{tpu_custom_call.1} parent=39 // pred_check
          %p607 = pneg %p151
        $region62: #{tpu_custom_call.1} parent=39 // pred_check_branch
          %609 = sbr.rel (%p607) target = $region64
        $region63: #{tpu_custom_call.1} parent=39 // pred_region
          %s611 = ssub.s32 128, 128
          %612 = vsyncadd [#allocation5], %s611
          %s614 = sshll.u32 [#allocation9], 4
          %s615 = int_to_ptr.vmem [resolvable:$true] %s614
          %617 = dma.vmem_to_hbm [thread:$0]  %s615, 128, %s5, [#allocation5]
        $region64: #{tpu_custom_call.1} parent=39 // pred_fallthru
          _
        // Predicated region
        $region65: #{tpu_custom_call.1} parent=39 // pred_check
          %p618 = pneg %p151
        $region66: #{tpu_custom_call.1} parent=39 // pred_check_branch
          %620 = sbr.rel (%p618) target = $region68
        $region67: #{tpu_custom_call.1} parent=39 // pred_region
          %621 = dma.done [#allocation5], 128
        $region68: #{tpu_custom_call.1} parent=39 // pred_fallthru
          _
      $region40: #{tpu_custom_call.1} parent=5 // pred_fallthru
        _
      %p622 = scmp.le.s32.totalorder 2, %s18
      // Predicated region
      $region69: #{tpu_custom_call.1} parent=5 // pred_check
        %p623 = pneg %p622
      $region70: #{tpu_custom_call.1} parent=5 // pred_check_branch
        %625 = sbr.rel (%p623) target = $region72
      $region71: #{tpu_custom_call.1} parent=5 // pred_region
        %s626 = ssub.s32 %s18, 2
      $region72: #{tpu_custom_call.1} parent=5 // pred_fallthru
        _
    $region6: #{tpu_custom_call.1} parent=1 // loop_footer
      %s22 = sadd.s32 1, %s18
    $region7: #{tpu_custom_call.1} parent=1 // loop_footer_branch
      %17 = sbr.rel target = $region3
    $region8: #{tpu_custom_call.1} parent=1 // loop_exit
      _
    %627 = vsyncpa [#allocation4], 1
    %s628 = scalar_lea.sflag [#allocation4], 1
    %629 = vsyncpa %s628, 1
    %630 = vsyncpa [#allocation7], 1
    %s631 = scalar_lea.sflag [#allocation7], 1
    %632 = vsyncpa %s631, 1
    %633 = vsyncpa [#allocation5], 1
    %s634 = scalar_lea.sflag [#allocation5], 1
    %635 = vsyncpa %s634, 1

</llo_original>
